<compile_context>
chip_gen: v7x
topology: tpu7x:2x2x1
jax: 0.10.0
libtpu: 0.0.40
codegen_flags: <defaults>
</compile_context>

<pallas_src>
import functools

import jax
import jax.numpy as jnp
from jax.experimental import pallas as pl
from jax.experimental.pallas import tpu as pltpu


def _cdiv(a, b):
    return -(-a // b)


def _vmem_limit_bytes():
    """Generation-aware scoped-VMEM limit (~0.75x physical capacity)."""
    try:
        info = pltpu.get_tpu_info()
        cap = getattr(info, "vmem_capacity_bytes", None)
        if cap:
            return int(0.75 * cap)
    except Exception:
        pass
    return 48 * 1024 * 1024  # conservative fallback (fits v7x's 64 MiB)


# ----------------------------------------------------------------------------
# Fused path: pool + excitation + scale in one kernel (one read, one write of x)
# ----------------------------------------------------------------------------
def se4_fused_kernel(x_ref, w1t_ref, w2t_ref, o_ref, *, inv_hw, use_mxu):
    # x_ref, o_ref: [Bt, C, HW]   w1t_ref: [C, Cr] (=W1.T)   w2t_ref: [Cr, C] (=W2.T)

    # --- squeeze: global average pool, f32 accumulation (no full-tile f32 copy).
    pooled = jnp.sum(x_ref[...], axis=-1, dtype=jnp.float32) * inv_hw      # [Bt, C]

    w1t = w1t_ref[...].astype(jnp.float32)
    w2t = w2t_ref[...].astype(jnp.float32)

    # --- excitation: two tiny FCs.
    if use_mxu:
        # Real batched matmuls on the otherwise-idle MXU once Bt is large enough.
        h = jnp.maximum(
            jnp.dot(pooled, w1t, preferred_element_type=jnp.float32), 0.0)  # [Bt, Cr]
        s = jax.nn.sigmoid(
            jnp.dot(h, w2t, preferred_element_type=jnp.float32))            # [Bt, C]
    else:
        # Small Bt: keep the degenerate FCs on the VPU (broadcast-mul + reduce).
        h = jnp.maximum(
            jnp.sum(pooled[:, :, None] * w1t[None, :, :], axis=1), 0.0)     # [Bt, Cr]
        s = jax.nn.sigmoid(
            jnp.sum(h[:, :, None] * w2t[None, :, :], axis=1))               # [Bt, C]

    # --- scale: re-read the tile from VMEM (cheap loads), lean epilogue
    #     (one mul + one store per element; only the tiny gate is f32).
    o_ref[...] = x_ref[...] * s[:, :, None].astype(o_ref.dtype)


# ----------------------------------------------------------------------------
# Large-feature-map fallback: HW-tiled pool kernel + HW-tiled scale kernel.
# ----------------------------------------------------------------------------
def se4_pool_kernel(x_ref, sum_ref, *, hw, t_hw):
    # x_ref: [Bt, C, t_hw]   sum_ref: [Bt, C, 1] (f32, resident across the HW axis)
    k = pl.program_id(1)

    @pl.when(k == 0)
    def _():
        sum_ref[...] = jnp.zeros_like(sum_ref)

    x = x_ref[...]
    # Mask the out-of-range tail of the last (partial) HW tile.
    col = k * t_hw + jax.lax.broadcasted_iota(jnp.int32, x.shape, 2)
    x = jnp.where(col < hw, x, jnp.zeros_like(x))
    sum_ref[...] = sum_ref[...] + jnp.sum(x, axis=-1, keepdims=True,
                                          dtype=jnp.float32)


def se4_scale_kernel(x_ref, g_ref, o_ref):
    # x_ref, o_ref: [Bt, C, t_hw]   g_ref: [Bt, C, 1]
    o_ref[...] = x_ref[...] * g_ref[...]


# ----------------------------------------------------------------------------
# Wrapper
# ----------------------------------------------------------------------------
def se4_layer(x, w1, w2):
    """SE forward.

    x : [B, C, H, W]  (NCHW, like PyTorch)
    w1: [C//r, C]     first nn.Linear weight (no bias)
    w2: [C, C//r]     second nn.Linear weight (no bias)
    """
    B, C, H, W = x.shape
    HW = H * W
    Cr = w1.shape[0]
    assert w1.shape == (Cr, C) and w2.shape == (C, Cr)

    x3 = x.reshape(B, C, HW)
    w1t = jnp.asarray(w1).T          # [C, Cr]
    w2t = jnp.asarray(w2).T          # [Cr, C]

    itemsize = jnp.dtype(x.dtype).itemsize
    w_itemsize = jnp.dtype(w1.dtype).itemsize
    w_bytes = (w1.size + w2.size) * w_itemsize

    vmem_limit = _vmem_limit_bytes()
    # Budget for the pipelined tiles: leave weights + ~2 MiB slack out of it.
    tile_budget = max(vmem_limit - w_bytes - (2 << 20), 1 << 20)

    per_image = C * HW * itemsize
    # 2 input buffers + 2 output buffers per resident batch image.
    bt_max = tile_budget // (4 * per_image)

    cost = pl.CostEstimate(
        flops=2 * B * C * HW + 4 * B * C * Cr,
        transcendentals=B * C,
        bytes_accessed=2 * B * C * HW * itemsize + 2 * C * Cr * w_itemsize,
    )

    if bt_max >= 1:
        # ------------------------------ fused path ------------------------------
        bt = int(min(bt_max, B))
        if B >= 2:
            # Keep at least 2 grid steps so v7x's two TensorCores both get work.
            bt = min(bt, _cdiv(B, 2))
        bt = max(bt, 1)
        num_steps = _cdiv(B, bt)
        use_mxu = bt >= 8

        kernel = functools.partial(se4_fused_kernel, inv_hw=1.0 / HW,
                                   use_mxu=use_mxu)

        out3 = pl.pallas_call(
            kernel,
            out_shape=jax.ShapeDtypeStruct((B, C, HW), x.dtype),
            grid=(num_steps,),
            in_specs=[
                pl.BlockSpec((bt, C, HW), lambda b: (b, 0, 0)),   # Bt images / step
                pl.BlockSpec((C, Cr), lambda b: (0, 0)),          # weights stay resident
                pl.BlockSpec((Cr, C), lambda b: (0, 0)),
            ],
            out_specs=pl.BlockSpec((bt, C, HW), lambda b: (b, 0, 0)),
            compiler_params=pltpu.CompilerParams(
                dimension_semantics=("parallel",),
                vmem_limit_bytes=vmem_limit,
            ),
            cost_estimate=cost,
        )(x3, w1t, w2t)
        return out3.reshape(B, C, H, W)

    # ----------------------- large-feature-map fallback -----------------------
    # A single image's (C, HW) tile exceeds the VMEM budget (v7x 64 MiB hits
    # first): pool over HW tiles, compute the tiny gate in plain JAX, then
    # scale over the same HW tiles.
    bt = 1
    t_hw = int(tile_budget // (4 * C * itemsize))
    t_hw = max(128, (t_hw // 128) * 128)
    if t_hw >= HW:
        t_hw = HW
    nb = _cdiv(B, bt)
    nk = _cdiv(HW, t_hw)

    sums = pl.pallas_call(
        functools.partial(se4_pool_kernel, hw=HW, t_hw=t_hw),
        out_shape=jax.ShapeDtypeStruct((B, C, 1), jnp.float32),
        grid=(nb, nk),
        in_specs=[pl.BlockSpec((bt, C, t_hw), lambda b, k: (b, 0, k))],
        out_specs=pl.BlockSpec((bt, C, 1), lambda b, k: (b, 0, 0)),
        compiler_params=pltpu.CompilerParams(
            dimension_semantics=("parallel", "arbitrary"),
            vmem_limit_bytes=vmem_limit,
        ),
    )(x3)

    pooled = sums[:, :, 0] * (1.0 / HW)                                     # [B, C] f32
    gate = jax.nn.sigmoid(
        jnp.maximum(pooled @ w1.T.astype(jnp.float32), 0.0)
        @ w2.T.astype(jnp.float32))                                         # [B, C] f32
    gate = gate.astype(x.dtype)[:, :, None]                                 # [B, C, 1]

    out3 = pl.pallas_call(
        se4_scale_kernel,
        out_shape=jax.ShapeDtypeStruct((B, C, HW), x.dtype),
        grid=(nb, nk),
        in_specs=[
            pl.BlockSpec((bt, C, t_hw), lambda b, k: (b, 0, k)),
            pl.BlockSpec((bt, C, 1), lambda b, k: (b, 0, 0)),
        ],
        out_specs=pl.BlockSpec((bt, C, t_hw), lambda b, k: (b, 0, k)),
        compiler_params=pltpu.CompilerParams(
            dimension_semantics=("parallel", "parallel"),
            vmem_limit_bytes=vmem_limit,
        ),
        cost_estimate=cost,
    )(x3, gate)
    return out3.reshape(B, C, H, W)


def reference_se4(x, w1, w2):
    """Pure-JAX reference mirroring the PyTorch forward."""
    y = jnp.mean(x, axis=(2, 3))                  # [B, C]
    y = jnp.maximum(y @ w1.T, 0.0)                # [B, C//r]
    y = jax.nn.sigmoid(y @ w2.T)                  # [B, C]
    return x * y[:, :, None, None]


if __name__ == "__main__":
    # Small shapes consistent with the module: B=2, C=8, H=W=16, reduction=4.
    B, C, H, W = 2, 8, 16, 16
    reduction = 4
    Cr = C // reduction

    key = jax.random.PRNGKey(0)
    kx, k1, k2 = jax.random.split(key, 3)

    x = jax.random.normal(kx, (B, C, H, W), dtype=jnp.float32)
    # PyTorch nn.Linear weight layouts: w1 is [C//r, C], w2 is [C, C//r].
    w1 = jax.random.normal(k1, (Cr, C), dtype=jnp.float32) * 0.1
    w2 = jax.random.normal(k2, (C, Cr), dtype=jnp.float32) * 0.1

    out = jax.block_until_ready(se4_layer(x, w1, w2))
    ref = reference_se4(x, w1, w2)

    assert out.shape == (B, C, H, W)
    assert jnp.allclose(out, ref, atol=1e-5, rtol=1e-5)

    print("KERNEL_OK")
</pallas_src>

<mosaic_0001>
module attributes {stable_mosaic.version = 11 : i64} {
  func.func @se4_fused_kernel(%arg0: i32, %arg1: memref<1x8x256xf32, #tpu.memory_space<vmem>>, %arg2: memref<8x2xf32, #tpu.memory_space<vmem>>, %arg3: memref<2x8xf32, #tpu.memory_space<vmem>>, %arg4: memref<1x8x256xf32, #tpu.memory_space<vmem>>) attributes {dimension_semantics = [#tpu.dimension_semantics<parallel>], iteration_bounds = array<i64: 2>, scalar_prefetch = 0 : i64, scratch_operands = 0 : i64, tpu.core_type = #tpu.core_type<tc>, window_params = [{transform_indices = @transform_0, window_bounds = array<i64: 1, 8, 256>}, {pipeline_mode = #tpu.pipeline_mode<synchronous>, transform_indices = @transform_1, window_bounds = array<i64: 8, 2>}, {pipeline_mode = #tpu.pipeline_mode<synchronous>, transform_indices = @transform_2, window_bounds = array<i64: 2, 8>}, {transform_indices = @transform_3, window_bounds = array<i64: 1, 8, 256>}]} {
    %c0 = arith.constant 0 : index
    %c0_0 = arith.constant 0 : index
    %c0_1 = arith.constant 0 : index
    %0 = vector.load %arg1[%c0, %c0_0, %c0_1] : memref<1x8x256xf32, #tpu.memory_space<vmem>>, vector<1x8x256xf32>
    %cst = arith.constant dense<0.000000e+00> : vector<1x8xf32>
    %1 = vector.multi_reduction <add>, %0, %cst [2] : vector<1x8x256xf32> to vector<1x8xf32>
    %cst_2 = arith.constant 3.906250e-03 : f32
    %2 = vector.broadcast %cst_2 : f32 to vector<1x8xf32>
    %3 = arith.mulf %1, %2 : vector<1x8xf32>
    %c0_3 = arith.constant 0 : index
    %c0_4 = arith.constant 0 : index
    %4 = vector.load %arg2[%c0_3, %c0_4] : memref<8x2xf32, #tpu.memory_space<vmem>>, vector<8x2xf32>
    %c0_5 = arith.constant 0 : index
    %c0_6 = arith.constant 0 : index
    %5 = vector.load %arg3[%c0_5, %c0_6] : memref<2x8xf32, #tpu.memory_space<vmem>>, vector<2x8xf32>
    %6 = vector.shape_cast %3 : vector<1x8xf32> to vector<1x8x1xf32>
    %7 = vector.shape_cast %4 : vector<8x2xf32> to vector<1x8x2xf32>
    %8 = vector.broadcast %6 : vector<1x8x1xf32> to vector<1x8x2xf32>
    %9 = arith.mulf %8, %7 : vector<1x8x2xf32>
    %cst_7 = arith.constant dense<0.000000e+00> : vector<1x2xf32>
    %10 = vector.multi_reduction <add>, %9, %cst_7 [1] : vector<1x8x2xf32> to vector<1x2xf32>
    %cst_8 = arith.constant 0.000000e+00 : f32
    %11 = vector.broadcast %cst_8 : f32 to vector<1x2xf32>
    %12 = arith.maximumf %10, %11 : vector<1x2xf32>
    %13 = vector.shape_cast %12 : vector<1x2xf32> to vector<1x2x1xf32>
    %14 = vector.shape_cast %5 : vector<2x8xf32> to vector<1x2x8xf32>
    %15 = vector.broadcast %13 : vector<1x2x1xf32> to vector<1x2x8xf32>
    %16 = arith.mulf %15, %14 : vector<1x2x8xf32>
    %cst_9 = arith.constant dense<0.000000e+00> : vector<1x8xf32>
    %17 = vector.multi_reduction <add>, %16, %cst_9 [1] : vector<1x2x8xf32> to vector<1x8xf32>
    %18 = arith.negf %17 : vector<1x8xf32>
    %19 = math.exp %18 : vector<1x8xf32>
    %cst_10 = arith.constant 1.000000e+00 : f32
    %20 = vector.broadcast %cst_10 : f32 to vector<1x8xf32>
    %21 = arith.addf %20, %19 : vector<1x8xf32>
    %22 = arith.divf %20, %21 : vector<1x8xf32>
    %c0_11 = arith.constant 0 : index
    %c0_12 = arith.constant 0 : index
    %c0_13 = arith.constant 0 : index
    %23 = vector.load %arg1[%c0_11, %c0_12, %c0_13] : memref<1x8x256xf32, #tpu.memory_space<vmem>>, vector<1x8x256xf32>
    %24 = vector.shape_cast %22 : vector<1x8xf32> to vector<1x8x1xf32>
    %25 = vector.broadcast %24 : vector<1x8x1xf32> to vector<1x8x256xf32>
    %26 = arith.mulf %23, %25 : vector<1x8x256xf32>
    %c0_14 = arith.constant 0 : index
    %c0_15 = arith.constant 0 : index
    %c0_16 = arith.constant 0 : index
    %27 = vector.load %arg4[%c0_14, %c0_15, %c0_16] : memref<1x8x256xf32, #tpu.memory_space<vmem>>, vector<1x8x256xf32>
    tpu.vector_store %arg4[%c0_14, %c0_15, %c0_16], %26 {strides = array<i32>} : memref<1x8x256xf32, #tpu.memory_space<vmem>>, vector<1x8x256xf32>,
    return
  }
  func.func @transform_0(%arg0: i32) -> (i32, i32, i32) {
    %c0_i32 = arith.constant 0 : i32
    %c0_i32_0 = arith.constant 0 : i32
    %c0_i32_1 = arith.constant 0 : i32
    return %arg0, %c0_i32, %c0_i32_0 : i32, i32, i32
  }
  func.func @transform_1(%arg0: i32) -> (i32, i32) {
    %c0_i32 = arith.constant 0 : i32
    %c0_i32_0 = arith.constant 0 : i32
    %c0_i32_1 = arith.constant 0 : i32
    return %c0_i32, %c0_i32_0 : i32, i32
  }
  func.func @transform_2(%arg0: i32) -> (i32, i32) {
    %c0_i32 = arith.constant 0 : i32
    %c0_i32_0 = arith.constant 0 : i32
    %c0_i32_1 = arith.constant 0 : i32
    return %c0_i32, %c0_i32_0 : i32, i32
  }
  func.func @transform_3(%arg0: i32) -> (i32, i32, i32) {
    %c0_i32 = arith.constant 0 : i32
    %c0_i32_0 = arith.constant 0 : i32
    %c0_i32_1 = arith.constant 0 : i32
    return %arg0, %c0_i32, %c0_i32_0 : i32, i32, i32
  }
}

</mosaic_0001>

<llo_original>
// kernel: tpu_custom_call.1
$region0: #{tpu_custom_call.1}
  #allocation0 [shape = 'u32[]', space=smem, size = 0x4, offset = 0x4, fixed_abs, tag = 'smem constant byte address 0x4 - core index']
  #allocation1 [shape = 'u32[144,128]{1,0:T(1,128)}', space=vmem, size = 0x12000, scoped, tag = 'internal scratch']
  %s0 = inlined_call_operand.hbm [shape: f32[2,8,256], index: 0, kind: input, shape index: {}]
  %s1 = inlined_call_operand.vmem [shape: f32[8,2], index: 1, kind: input, shape index: {}]
  %s2 = inlined_call_operand.vmem [shape: f32[2,8], index: 2, kind: input, shape index: {}]
  %s3 = inlined_call_operand.hbm [shape: f32[2,8,256], index: 3, kind: output, shape index: {}]
  %s4 = sld [smem:[#allocation0]]
  $region49: #{tpu_custom_call.1} parent=0
    _
  %s6 = ssub.s32 1, %s4
  %s7 = scalar_select 0, %s6, %s4
  $region1: #{tpu_custom_call.1} parent=0
    #allocation2 [shape = 'u8[16384]{0}', space=vmem, size = 0x4000, scoped, tag = 'input window, operand 0']
    #allocation3 [shape = 's32[2]{0}', space=sflag, size = 0x8, scoped, tag = 'scoped memory for tpu_custom_call.1']
    #allocation4 [shape = 's32[2]{0}', space=sflag, size = 0x8, scoped, tag = 'scoped memory for tpu_custom_call.1']
    #allocation5 [shape = 'u8[16384]{0}', space=vmem, size = 0x4000, scoped, tag = 'output window, operand 0']
    %8 = vsyncpa [#allocation3], 0
    %s9 = scalar_lea.sflag [#allocation3], 1
    %10 = vsyncpa %s9, 0
    %11 = vsyncpa [#allocation4], 0
    %s12 = scalar_lea.sflag [#allocation4], 1
    %13 = vsyncpa %s12, 0
    loop: start=0, step=1, limit=4
    $region2: #{tpu_custom_call.1} parent=1 // loop_pre_header
      _
    $region3: #{tpu_custom_call.1} parent=1 // loop_header
      %s15 = sphi 0, %s19
      %p16 = scmp.ge.s32.totalorder %s15, 4
      %s25 = sphi 0, %s27
      %s28 = sphi 0, %s25
      %s29 = sphi 0, %s28
      %s45 = sphi 0, %s29
      %s49 = sphi 0, %s49
      %s51 = sphi 0, %s49
      %s52 = sphi 0, %s51
      %s66 = sphi 0, %s52
      %s70 = sphi 0, %s70
      %s72 = sphi 0, %s70
      %s73 = sphi 0, %s72
      %s87 = sphi 0, %s73
      %s93 = sphi 0, %s95
      %s96 = sphi 0, %s93
      %s97 = sphi 0, %s96
      %s113 = sphi 0, %s97
    $region4: #{tpu_custom_call.1} parent=1 // loop_header_branch
      %18 = sbr.rel (%p16) target = $region8
    $region5: #{tpu_custom_call.1} parent=1 // loop_body
      %s20 = ssub.s32 %s15, 1
      %s21 = ssub.s32 %s15, 2
      %s22 = sadd.s32 %s15, 1
      %s23 = ssub.s32 %s15, %s22
      %p24 = scmp.eq.s32.totalorder %s23, 0
      %s26 = sadd.s32 %s25, 1
      %s27 = scalar_select %p24, %s25, %s26
      %p30 = pneg %p24
      %p31 = scmp.eq.s32.totalorder %s15, 1
      %p32 = por %p30, %p31
      %p33 = scmp.ne.s32.totalorder %s25, %s28
      %p34 = scmp.eq.s32.totalorder %s15, 0
      %p35 = por %p33, %p34
      %p36 = scmp.ne.s32.totalorder %s25, %s28
      %p37 = scmp.eq.s32.totalorder %s20, 1
      %p38 = por %p36, %p37
      %p39 = scmp.ne.s32.totalorder %s28, %s29
      %p40 = scmp.eq.s32.totalorder %s20, 0
      %p41 = por %p39, %p40
      %p42 = scmp.ne.s32.totalorder %s28, %s29
      %p43 = scmp.eq.s32.totalorder %s21, 1
      %p44 = por %p42, %p43
      %p46 = scmp.ne.s32.totalorder %s29, %s45
      %p47 = scmp.eq.s32.totalorder %s21, 0
      %p48 = por %p46, %p47
      %s50 = sadd.s32 %s49, 1
      %p53 = scmp.eq.s32.totalorder %s15, 1
      %p54 = scmp.ne.s32.totalorder %s49, %s51
      %p55 = scmp.eq.s32.totalorder %s15, 0
      %p56 = por %p54, %p55
      %p57 = scmp.ne.s32.totalorder %s49, %s51
      %p58 = scmp.eq.s32.totalorder %s20, 1
      %p59 = por %p57, %p58
      %p60 = scmp.ne.s32.totalorder %s51, %s52
      %p61 = scmp.eq.s32.totalorder %s20, 0
      %p62 = por %p60, %p61
      %p63 = scmp.ne.s32.totalorder %s51, %s52
      %p64 = scmp.eq.s32.totalorder %s21, 1
      %p65 = por %p63, %p64
      %p67 = scmp.ne.s32.totalorder %s52, %s66
      %p68 = scmp.eq.s32.totalorder %s21, 0
      %p69 = por %p67, %p68
      %s71 = sadd.s32 %s70, 1
      %p74 = scmp.eq.s32.totalorder %s15, 1
      %p75 = scmp.ne.s32.totalorder %s70, %s72
      %p76 = scmp.eq.s32.totalorder %s15, 0
      %p77 = por %p75, %p76
      %p78 = scmp.ne.s32.totalorder %s70, %s72
      %p79 = scmp.eq.s32.totalorder %s20, 1
      %p80 = por %p78, %p79
      %p81 = scmp.ne.s32.totalorder %s72, %s73
      %p82 = scmp.eq.s32.totalorder %s20, 0
      %p83 = por %p81, %p82
      %p84 = scmp.ne.s32.totalorder %s72, %s73
      %p85 = scmp.eq.s32.totalorder %s21, 1
      %p86 = por %p84, %p85
      %p88 = scmp.ne.s32.totalorder %s73, %s87
      %p89 = scmp.eq.s32.totalorder %s21, 0
      %p90 = por %p88, %p89
      %s91 = ssub.s32 %s15, %s22
      %p92 = scmp.eq.s32.totalorder %s91, 0
      %s94 = sadd.s32 %s93, 1
      %s95 = scalar_select %p92, %s93, %s94
      %p98 = pneg %p92
      %p99 = scmp.eq.s32.totalorder %s15, 1
      %p100 = por %p98, %p99
      %p101 = scmp.ne.s32.totalorder %s93, %s96
      %p102 = scmp.eq.s32.totalorder %s15, 0
      %p103 = por %p101, %p102
      %p104 = scmp.ne.s32.totalorder %s93, %s96
      %p105 = scmp.eq.s32.totalorder %s20, 1
      %p106 = por %p104, %p105
      %p107 = scmp.ne.s32.totalorder %s96, %s97
      %p108 = scmp.eq.s32.totalorder %s20, 0
      %p109 = por %p107, %p108
      %p110 = scmp.ne.s32.totalorder %s96, %s97
      %p111 = scmp.eq.s32.totalorder %s21, 1
      %p112 = por %p110, %p111
      %p114 = scmp.ne.s32.totalorder %s97, %s113
      %p115 = scmp.eq.s32.totalorder %s21, 0
      %p116 = por %p114, %p115
      %p117 = scmp.le.s32.totalorder 1, %s15
      %p118 = scmp.lt.s32.totalorder %s15, 3
      %p119 = pnand %p117, %p118
      %p120 = pneg %p119
      // Predicated region
      $region9: #{tpu_custom_call.1} parent=5 // pred_check
        _
      $region10: #{tpu_custom_call.1} parent=5 // pred_check_branch
        %122 = sbr.rel (%p119) target = $region12
      $region11: #{tpu_custom_call.1} parent=5 // pred_region
        %s123 = ssub.s32 %s15, 1
        // Predicated region
        $region13: #{tpu_custom_call.1} parent=11 // pred_check
          %p124 = pneg %p62
        $region14: #{tpu_custom_call.1} parent=11 // pred_check_branch
          %126 = sbr.rel (%p124) target = $region16
        $region15: #{tpu_custom_call.1} parent=11 // pred_region
          _
        $region16: #{tpu_custom_call.1} parent=11 // pred_fallthru
          _
        // Predicated region
        $region17: #{tpu_custom_call.1} parent=11 // pred_check
          %p127 = pneg %p83
        $region18: #{tpu_custom_call.1} parent=11 // pred_check_branch
          %129 = sbr.rel (%p127) target = $region20
        $region19: #{tpu_custom_call.1} parent=11 // pred_region
          _
        $region20: #{tpu_custom_call.1} parent=11 // pred_fallthru
          _
      $region12: #{tpu_custom_call.1} parent=5 // pred_fallthru
        _
      %p130 = scmp.lt.s32.totalorder %s15, 2
      // Predicated region
      $region21: #{tpu_custom_call.1} parent=5 // pred_check
        %p131 = pneg %p130
      $region22: #{tpu_custom_call.1} parent=5 // pred_check_branch
        %133 = sbr.rel (%p131) target = $region24
      $region23: #{tpu_custom_call.1} parent=5 // pred_region
        // Predicated region
        $region25: #{tpu_custom_call.1} parent=23 // pred_check
          %p134 = pneg %p35
        $region26: #{tpu_custom_call.1} parent=23 // pred_check_branch
          %136 = sbr.rel (%p134) target = $region28
        $region27: #{tpu_custom_call.1} parent=23 // pred_region
          %s137 = sand.u32 %s25, 1
          %s138 = scalar_lea.sflag [#allocation3], %s137
          %s139 = sand.u32 %s25, 1
          %s140 = smul.addr %s139, 16
          %s141 = scalar_lea.vmem [#allocation2], %s140
          %s143 = ssub.s32 256, 256
          %144 = vsyncadd %s138, %s143
          %s145 = smul.addr %s15, 2
          %s146 = smul.addr %s145, 128
          %s147 = scalar_lea.hbm %s0, %s146
          %s149 = sshll.u32 %s141, 4
          %s150 = int_to_ptr.vmem [resolvable:$true] %s149
          %152 = dma.hbm_to_vmem [thread:$0]  %s147, 256, %s150, %s138
        $region28: #{tpu_custom_call.1} parent=23 // pred_fallthru
          _
      $region24: #{tpu_custom_call.1} parent=5 // pred_fallthru
        _
      %p153 = scmp.le.s32.totalorder 1, %s15
      %p154 = scmp.lt.s32.totalorder %s15, 3
      %p155 = pnand %p153, %p154
      %p156 = pneg %p155
      // Predicated region
      $region29: #{tpu_custom_call.1} parent=5 // pred_check
        _
      $region30: #{tpu_custom_call.1} parent=5 // pred_check_branch
        %158 = sbr.rel (%p155) target = $region32
      $region31: #{tpu_custom_call.1} parent=5 // pred_region
        %s159 = ssub.s32 %s15, 1
        %s160 = sand.u32 %s28, 1
        %s161 = scalar_lea.sflag [#allocation3], %s160
        %s162 = sand.u32 %s28, 1
        %s163 = smul.addr %s162, 16
        %s164 = scalar_lea.vmem [#allocation2], %s163
        // Predicated region
        $region33: #{tpu_custom_call.1} parent=31 // pred_check
          %p165 = pneg %p41
        $region34: #{tpu_custom_call.1} parent=31 // pred_check_branch
          %167 = sbr.rel (%p165) target = $region36
        $region35: #{tpu_custom_call.1} parent=31 // pred_region
          %168 = dma.done %s161, 256
        $region36: #{tpu_custom_call.1} parent=31 // pred_fallthru
          _
        %s169 = sand.u32 %s28, 1
        %s170 = scalar_lea.sflag [#allocation3], %s169
        %s171 = sand.u32 %s28, 1
        %s172 = smul.addr %s171, 16
        %s173 = scalar_lea.vmem [#allocation2], %s172
        %p174 = pneg %p41
        %p175 = pneg %p38
        %p176 = pneg %p62
        %p177 = pneg %p59
        %p178 = pneg %p83
        %p179 = pneg %p80
        %p180 = pneg %p109
        %p181 = pneg %p106
        %s182 = sand.u32 %s96, 1
        %s183 = scalar_lea.sflag [#allocation4], %s182
        %s184 = sand.u32 %s96, 1
        %s185 = smul.addr %s184, 16
        %s186 = scalar_lea.vmem [#allocation5], %s185
        %v187 = vld [vmem:[%s164] sm:$0xff]
        %v188 = vld [vmem:[%s164 + $0x8] sm:$0xff]
        %v189 = vadd.f32 %v187, %v188
        %190 = vadd.xlane.f32.xlu0 %v189
        %v191 = vpop.xlane.xlu0 %190
        %v192 = vmul.f32 %v191, 0.00390625
        %v193 = vld [vmem:[%s1] sm:$0xff]
        %v194 = vld [vmem:[%s2] sm:$0x3]
        %v195 = vmul.f32 %v192, %v193
        %vm196 = vcmask 15360
        %v197 = vsel %vm196, %v195, 0.0
        %v198 = vrot.slane %v197, 4
        %v199 = vadd.f32 %v197, %v198
        %v200 = vrot.slane %v199, 2
        %v201 = vadd.f32 %v199, %v200
        %v202 = vrot.slane %v201, 1
        %v203 = vadd.f32 %v201, %v202
        %v204 = vmax.f32 %v203, 0.0
        %206 = vbcast.lane.b32.xlu0 %v204, 256
        %v207 = vpop.permute.xlu0 %206
        %v208 = vmul.f32 %v207, %v194
        %vm209 = vcmask 58368
        %v210 = vsel %vm209, %v208, 0.0
        %v211 = vrot.slane %v210, 4
        %v212 = vadd.f32 %v210, %v211
        %v213 = vrot.slane %v212, 2
        %v214 = vadd.f32 %v212, %v213
        %v215 = vrot.slane %v214, 1
        %v216 = vadd.f32 %v214, %v215
        %v217 = vxor.u32 %v216, 2147483648
        %v218 = vmul.f32 %v217, 1.442695
        %v219 = vpow.pop %v218
        %v220 = vadd.f32 %v219, 1.0
        %v221 = vrcp.pop %v220
        %v222 = vmul.f32 1.0, %v221
        %224 = vbcast.lane.b32.xlu0 %v222, 256
        %v225 = vpop.permute.xlu0 %224
        %v226 = vmul.f32 %v187, %v225
        %v227 = vmul.f32 %v188, %v225
        %228 = vst [vmem:[%s186] sm:$0xff] %v226
        %229 = vst [vmem:[%s186 + $0x8] sm:$0xff] %v227
        %s230 = sand.u32 %s96, 1
        %s231 = scalar_lea.sflag [#allocation4], %s230
        %s232 = sand.u32 %s96, 1
        %s233 = smul.addr %s232, 16
        %s234 = scalar_lea.vmem [#allocation5], %s233
        // Predicated region
        $region37: #{tpu_custom_call.1} parent=31 // pred_check
          %p235 = pneg %p106
        $region38: #{tpu_custom_call.1} parent=31 // pred_check_branch
          %237 = sbr.rel (%p235) target = $region40
        $region39: #{tpu_custom_call.1} parent=31 // pred_region
          %s239 = ssub.s32 256, 256
          %240 = vsyncadd %s231, %s239
          %s241 = smul.addr %s20, 2
          %s242 = smul.addr %s241, 128
          %s243 = scalar_lea.hbm %s3, %s242
          %s245 = sshll.u32 %s234, 4
          %s246 = int_to_ptr.vmem [resolvable:$true] %s245
          %248 = dma.vmem_to_hbm [thread:$0]  %s246, 256, %s243, %s231
        $region40: #{tpu_custom_call.1} parent=31 // pred_fallthru
          _
      $region32: #{tpu_custom_call.1} parent=5 // pred_fallthru
        _
      %p249 = scmp.le.s32.totalorder 2, %s15
      // Predicated region
      $region41: #{tpu_custom_call.1} parent=5 // pred_check
        %p250 = pneg %p249
      $region42: #{tpu_custom_call.1} parent=5 // pred_check_branch
        %252 = sbr.rel (%p250) target = $region44
      $region43: #{tpu_custom_call.1} parent=5 // pred_region
        %s253 = ssub.s32 %s15, 2
        // Predicated region
        $region45: #{tpu_custom_call.1} parent=43 // pred_check
          %p254 = pneg %p112
        $region46: #{tpu_custom_call.1} parent=43 // pred_check_branch
          %256 = sbr.rel (%p254) target = $region48
        $region47: #{tpu_custom_call.1} parent=43 // pred_region
          %s257 = sand.u32 %s97, 1
          %s258 = scalar_lea.sflag [#allocation4], %s257
          %s259 = sand.u32 %s97, 1
          %s260 = smul.addr %s259, 16
          %s261 = scalar_lea.vmem [#allocation5], %s260
          %262 = dma.done %s258, 256
        $region48: #{tpu_custom_call.1} parent=43 // pred_fallthru
          _
      $region44: #{tpu_custom_call.1} parent=5 // pred_fallthru
        _
    $region6: #{tpu_custom_call.1} parent=1 // loop_footer
      %s19 = sadd.s32 1, %s15
    $region7: #{tpu_custom_call.1} parent=1 // loop_footer_branch
      %14 = sbr.rel target = $region3
    $region8: #{tpu_custom_call.1} parent=1 // loop_exit
      _
    %263 = vsyncpa [#allocation3], 1
    %s264 = scalar_lea.sflag [#allocation3], 1
    %265 = vsyncpa %s264, 1
    %266 = vsyncpa [#allocation4], 1
    %s267 = scalar_lea.sflag [#allocation4], 1
    %268 = vsyncpa %s267, 1

</llo_original>
